<compile_context>
chip_gen: v5e
topology: v5e:2x2
jax: 0.10.0
libtpu: 0.0.40
codegen_flags: <defaults>
</compile_context>

<pallas_src>
import jax
import jax.numpy as jnp
from jax.experimental import pallas as pl
from jax.experimental.pallas import tpu as pltpu


# Wide lane dimension (multiple of 128) -> wide, unmasked vld/vst per row.
_LANES = 1024
# 512 rows * 1024 lanes * 4 B = 2 MiB per f32 tile; 4x resident (double-buffered
# in + out) = 8 MiB, comfortably inside every generation's scoped VMEM budget.
_MAX_BLOCK_ROWS = 512


def _copy_kernel(x_ref, o_ref):
    # Whole-tile lane-dense copy: wide unmasked stores, pure DMA-bound.
    o_ref[...] = x_ref[...]


def _block_rows_for(rows, dtype):
    """Row-block size: full array if small, else a fixed large tile whose row
    count is a multiple of the sublane-packing granularity for the dtype
    (8 rows/vreg for 32-bit, 16 for bf16, 32 for int8)."""
    if rows <= _MAX_BLOCK_ROWS:
        return rows  # block dims == full array dims always satisfy the tiling rule
    itemsize = jnp.dtype(dtype).itemsize
    gran = 8 * max(1, 4 // max(1, itemsize))
    return (_MAX_BLOCK_ROWS // gran) * gran


@jax.jit
def _identity_copy(x):
    """Lane-dense tiled identity copy of `x` through a Pallas kernel."""
    total = x.size
    padded_total = -(-total // _LANES) * _LANES  # static at trace time

    flat = x.reshape(-1)
    if padded_total != total:
        # Pad the flat view so the tiled lane-dense path is always taken.
        flat = jnp.pad(flat, (0, padded_total - total))

    rows = padded_total // _LANES
    x2d = flat.reshape(rows, _LANES)

    block_rows = _block_rows_for(rows, x.dtype)
    grid = (pl.cdiv(rows, block_rows),)  # Pallas handles a ragged last block

    out2d = pl.pallas_call(
        _copy_kernel,
        out_shape=jax.ShapeDtypeStruct((rows, _LANES), x.dtype),
        grid_spec=pl.GridSpec(
            grid=grid,
            in_specs=[pl.BlockSpec((block_rows, _LANES), lambda i: (i, 0))],
            out_specs=pl.BlockSpec((block_rows, _LANES), lambda i: (i, 0)),
        ),
        # Output reuses the input HBM buffer: no extra allocation / footprint.
        input_output_aliases={0: 0},
        compiler_params=pltpu.CompilerParams(
            # Independent row-tile axis: shard across TensorCores on v7x.
            dimension_semantics=("parallel",),
        ),
    )(x2d)

    return out2d.reshape(-1)[:total].reshape(x.shape)


def ex2d_unet_pallas(x):
    """Pallas analogue of Ex2DUnet.forward.

    Returns (module_output, kernel_output): module_output is None, exactly
    matching the PyTorch module's forward() (whose body is `pass`); the
    kernel_output is a device-side identity passthrough produced by the
    Pallas kernel so the TPU path is exercised.
    """
    module_output = None  # Ex2DUnet.forward returns None
    kernel_output = _identity_copy(x)
    return module_output, kernel_output


if __name__ == "__main__":
    key = jax.random.PRNGKey(0)
    # Small NCHW input consistent with a 2D segmentation net: batch=2,
    # channels=4, spatial=16x16.  Total elements = 2048 -> (2, 1024) slab.
    x = jax.random.normal(key, (2, 4, 16, 16), dtype=jnp.float32)

    module_out, kernel_out = ex2d_unet_pallas(x)
    kernel_out = jax.block_until_ready(kernel_out)

    # Sanity checks: module semantics (None) and kernel correctness (identity).
    assert module_out is None
    assert kernel_out.shape == x.shape
    assert kernel_out.dtype == x.dtype
    assert bool(jnp.allclose(kernel_out, x))

    print("KERNEL_OK")
</pallas_src>

<mosaic_0001>
module attributes {stable_mosaic.version = 11 : i64} {
  func.func @_copy_kernel(%arg0: i32, %arg1: memref<2x1024xf32, #tpu.memory_space<vmem>>, %arg2: memref<2x1024xf32, #tpu.memory_space<vmem>>) attributes {dimension_semantics = [#tpu.dimension_semantics<parallel>], iteration_bounds = array<i64: 1>, scalar_prefetch = 0 : i64, scratch_operands = 0 : i64, tpu.core_type = #tpu.core_type<tc>, window_params = [{transform_indices = @transform_0, window_bounds = array<i64: 2, 1024>}, {transform_indices = @transform_1, window_bounds = array<i64: 2, 1024>}]} {
    %c0 = arith.constant 0 : index
    %c0_0 = arith.constant 0 : index
    %0 = vector.load %arg1[%c0, %c0_0] : memref<2x1024xf32, #tpu.memory_space<vmem>>, vector<2x1024xf32>
    %c0_1 = arith.constant 0 : index
    %c0_2 = arith.constant 0 : index
    %1 = vector.load %arg2[%c0_1, %c0_2] : memref<2x1024xf32, #tpu.memory_space<vmem>>, vector<2x1024xf32>
    tpu.vector_store %arg2[%c0_1, %c0_2], %0 {strides = array<i32>} : memref<2x1024xf32, #tpu.memory_space<vmem>>, vector<2x1024xf32>,
    return
  }
  func.func @transform_0(%arg0: i32) -> (i32, i32) {
    %c0_i32 = arith.constant 0 : i32
    %c0_i32_0 = arith.constant 0 : i32
    return %arg0, %c0_i32 : i32, i32
  }
  func.func @transform_1(%arg0: i32) -> (i32, i32) {
    %c0_i32 = arith.constant 0 : i32
    %c0_i32_0 = arith.constant 0 : i32
    return %arg0, %c0_i32 : i32, i32
  }
}

</mosaic_0001>

<llo_original>
// kernel: _identity_copy.1
$region0: #{_identity_copy.1}
  #allocation0 [shape = 'u32[]', space=smem, size = 0x4, offset = 0x4, fixed_abs, tag = 'smem constant byte address 0x4 - core index']
  #allocation1 [shape = 'u32[72,128]{1,0:T(1,128)}', space=vmem, size = 0x9000, scoped, tag = 'internal scratch']
  %s0 = inlined_call_operand.vmem [shape: f32[2,1024], index: 0, kind: input, shape index: {}, may-alias: {0,1}]
  %s1 = inlined_call_operand.vmem [shape: f32[2,1024], index: 1, kind: output, shape index: {}, may-alias: {0,1}]
  %s2 = sld [smem:[#allocation0]]
  $region14: #{_identity_copy.1} parent=0
    _
  %s4 = ssub.s32 1, %s2
  %s5 = scalar_select 0, %s4, %s2
  // Predicated region
  $region2: #{_identity_copy.1} parent=0 // pred_check
    _
  $region3: #{_identity_copy.1} parent=0 // pred_check_branch
    %7 = sbr.rel (0) target = $region5
  $region4: #{_identity_copy.1} parent=0 // pred_region
    _
  $region5: #{_identity_copy.1} parent=0 // pred_fallthru
    _
  %v8 = vld [vmem:[%s0] sm:$0xff]
  %v9 = vld [vmem:[%s0 + $0x8] sm:$0xff]
  %10 = vst [vmem:[%s1] sm:$0xff] %v8
  %11 = vst [vmem:[%s1 + $0x8] sm:$0xff] %v9
  // Predicated region
  $region6: #{_identity_copy.1} parent=0 // pred_check
    _
  $region7: #{_identity_copy.1} parent=0 // pred_check_branch
    %13 = sbr.rel (0) target = $region9
  $region8: #{_identity_copy.1} parent=0 // pred_region
    _
  $region9: #{_identity_copy.1} parent=0 // pred_fallthru
    _
  // Predicated region
  $region10: #{_identity_copy.1} parent=0 // pred_check
    _
  $region11: #{_identity_copy.1} parent=0 // pred_check_branch
    %15 = sbr.rel (0) target = $region13
  $region12: #{_identity_copy.1} parent=0 // pred_region
    _
  $region13: #{_identity_copy.1} parent=0 // pred_fallthru
    _

</llo_original>
